<compile_context>
chip_gen: v7x
topology: tpu7x:2x2x1
jax: 0.10.0
libtpu: 0.0.40
codegen_flags: <defaults>
</compile_context>

<pallas_src>
import jax
import jax.numpy as jnp
from jax.experimental import pallas as pl
from jax.experimental.pallas import tpu as pltpu


def _model_kernel(x_ref, wb_ref, o_ref):
    # x_ref:  (B, IN)      in SMEM (scalar reads, small B only)
    # wb_ref: (IN+1, OUT)  in VMEM, rows 0..IN-1 = weight^T, row IN = bias
    # o_ref:  (B, OUT)     in VMEM, f32
    B, OUT = o_ref.shape
    K = wb_ref.shape[0] - 1

    # Linear via VPU FMA chain per row; accumulator initialized with the bias row.
    # Static Python unroll over the tiny fixed K=5 contraction and tiny B.
    rows = []
    for b in range(B):
        acc = wb_ref[K:K + 1, :]                     # (1, OUT) bias row
        for k in range(K):
            acc = acc + x_ref[b, k] * wb_ref[k:k + 1, :]   # sreg splat * vreg FMA
        rows.append(acc)
    v1 = rows[0] if B == 1 else jnp.concatenate(rows, axis=0)

    # torch.clamp(min(v1), min=max(v1), max=6)  ==  min(max(v1), 6)   (exact)
    c = jnp.minimum(jnp.max(v1), jnp.float32(6.0))   # scalar

    o_ref[...] = v1 * c


def prepare_params(weight, bias):
    """One-time parameter prep (hoisted out of the per-call path).

    weight: (OUT, IN) PyTorch layout.  Returns a single (IN+1, OUT) array whose
    first IN rows are weight^T (lane-aligned contraction rows) and whose last
    row is the bias — folding bias into the weight operand cuts the kernel to
    two inputs.
    """
    return jnp.concatenate([weight.T, bias.reshape(1, -1)], axis=0)


@jax.jit
def model_forward(x, wb):
    """x: (B, IN) f32; wb: (IN+1, OUT) f32 (last row = bias)."""
    B = x.shape[0]
    OUT = wb.shape[1]
    return pl.pallas_call(
        _model_kernel,
        out_shape=jax.ShapeDtypeStruct((B, OUT), jnp.float32),
        # Tiny problem: whole arrays fit on-chip; full-array blocks, no grid.
        in_specs=[
            pl.BlockSpec(memory_space=pltpu.MemorySpace.SMEM),   # x (scalar reads)
            pl.BlockSpec(memory_space=pltpu.MemorySpace.VMEM),   # fused weight+bias
        ],
        out_specs=pl.BlockSpec(memory_space=pltpu.MemorySpace.VMEM),
    )(x, wb)


if __name__ == "__main__":
    key = jax.random.PRNGKey(0)
    k_x, k_w, k_b = jax.random.split(key, 3)

    IN_F, OUT_F, BATCH = 5, 8, 1

    # Deterministic "PyTorch-like" Linear init: U(-1/sqrt(in), 1/sqrt(in))
    bound = 1.0 / (IN_F ** 0.5)
    weight = jax.random.uniform(k_w, (OUT_F, IN_F), jnp.float32, -bound, bound)
    bias = jax.random.uniform(k_b, (OUT_F,), jnp.float32, -bound, bound)

    x1 = jax.random.normal(k_x, (BATCH, IN_F), jnp.float32)

    # Parameter prep happens once, outside the jitted hot path.
    wb = prepare_params(weight, bias)

    out = model_forward(x1, wb)
    out = jax.block_until_ready(out)

    # Pure-JAX reference check (uses the ORIGINAL clamp expression).
    v1 = x1 @ weight.T + bias
    c = jnp.minimum(jnp.maximum(jnp.min(v1), jnp.max(v1)), 6.0)
    ref = v1 * c
    assert out.shape == (BATCH, OUT_F)
    assert jnp.allclose(out, ref, atol=1e-5, rtol=1e-5)

    print("KERNEL_OK")
</pallas_src>

<mosaic_0001>
module attributes {stable_mosaic.version = 11 : i64} {
  func.func @_model_kernel(%arg0: memref<1x5xf32, #tpu.memory_space<smem>>, %arg1: memref<6x8xf32, #tpu.memory_space<vmem>>, %arg2: memref<1x8xf32, #tpu.memory_space<vmem>>) attributes {dimension_semantics = [], scalar_prefetch = 0 : i64, scratch_operands = 0 : i64, tpu.core_type = #tpu.core_type<tc>} {
    %c5 = arith.constant 5 : index
    %c0 = arith.constant 0 : index
    %0 = vector.load %arg1[%c5, %c0] : memref<6x8xf32, #tpu.memory_space<vmem>>, vector<1x8xf32>
    %c0_0 = arith.constant 0 : index
    %c0_1 = arith.constant 0 : index
    %1 = memref.load %arg0[%c0_0, %c0_1] : memref<1x5xf32, #tpu.memory_space<smem>>
    %c0_2 = arith.constant 0 : index
    %c0_3 = arith.constant 0 : index
    %2 = vector.load %arg1[%c0_2, %c0_3] : memref<6x8xf32, #tpu.memory_space<vmem>>, vector<1x8xf32>
    %3 = vector.broadcast %1 : f32 to vector<1x8xf32>
    %4 = arith.mulf %3, %2 : vector<1x8xf32>
    %5 = arith.addf %0, %4 : vector<1x8xf32>
    %c0_4 = arith.constant 0 : index
    %c1 = arith.constant 1 : index
    %6 = memref.load %arg0[%c0_4, %c1] : memref<1x5xf32, #tpu.memory_space<smem>>
    %c1_5 = arith.constant 1 : index
    %c0_6 = arith.constant 0 : index
    %7 = vector.load %arg1[%c1_5, %c0_6] : memref<6x8xf32, #tpu.memory_space<vmem>>, vector<1x8xf32>
    %8 = vector.broadcast %6 : f32 to vector<1x8xf32>
    %9 = arith.mulf %8, %7 : vector<1x8xf32>
    %10 = arith.addf %5, %9 : vector<1x8xf32>
    %c0_7 = arith.constant 0 : index
    %c2 = arith.constant 2 : index
    %11 = memref.load %arg0[%c0_7, %c2] : memref<1x5xf32, #tpu.memory_space<smem>>
    %c2_8 = arith.constant 2 : index
    %c0_9 = arith.constant 0 : index
    %12 = vector.load %arg1[%c2_8, %c0_9] : memref<6x8xf32, #tpu.memory_space<vmem>>, vector<1x8xf32>
    %13 = vector.broadcast %11 : f32 to vector<1x8xf32>
    %14 = arith.mulf %13, %12 : vector<1x8xf32>
    %15 = arith.addf %10, %14 : vector<1x8xf32>
    %c0_10 = arith.constant 0 : index
    %c3 = arith.constant 3 : index
    %16 = memref.load %arg0[%c0_10, %c3] : memref<1x5xf32, #tpu.memory_space<smem>>
    %c3_11 = arith.constant 3 : index
    %c0_12 = arith.constant 0 : index
    %17 = vector.load %arg1[%c3_11, %c0_12] : memref<6x8xf32, #tpu.memory_space<vmem>>, vector<1x8xf32>
    %18 = vector.broadcast %16 : f32 to vector<1x8xf32>
    %19 = arith.mulf %18, %17 : vector<1x8xf32>
    %20 = arith.addf %15, %19 : vector<1x8xf32>
    %c0_13 = arith.constant 0 : index
    %c4 = arith.constant 4 : index
    %21 = memref.load %arg0[%c0_13, %c4] : memref<1x5xf32, #tpu.memory_space<smem>>
    %c4_14 = arith.constant 4 : index
    %c0_15 = arith.constant 0 : index
    %22 = vector.load %arg1[%c4_14, %c0_15] : memref<6x8xf32, #tpu.memory_space<vmem>>, vector<1x8xf32>
    %23 = vector.broadcast %21 : f32 to vector<1x8xf32>
    %24 = arith.mulf %23, %22 : vector<1x8xf32>
    %25 = arith.addf %20, %24 : vector<1x8xf32>
    %26 = vector.shape_cast %25 : vector<1x8xf32> to vector<1x1x8xf32>
    %cst = arith.constant dense<0xFF800000> : vector<1xf32>
    %27 = vector.multi_reduction <maximumf>, %26, %cst [1, 2] : vector<1x1x8xf32> to vector<1xf32>
    %28 = vector.shape_cast %27 : vector<1xf32> to vector<1x1x1xf32>
    %29 = vector.extract %28[0, 0, 0] : f32 from vector<1x1x1xf32>
    %cst_16 = arith.constant 6.000000e+00 : f32
    %30 = arith.minimumf %29, %cst_16 : f32
    %31 = vector.broadcast %30 : f32 to vector<1x8xf32>
    %32 = arith.mulf %25, %31 : vector<1x8xf32>
    %c0_17 = arith.constant 0 : index
    %c0_18 = arith.constant 0 : index
    %33 = vector.load %arg2[%c0_17, %c0_18] : memref<1x8xf32, #tpu.memory_space<vmem>>, vector<1x8xf32>
    tpu.vector_store %arg2[%c0_17, %c0_18], %32 {strides = array<i32>} : memref<1x8xf32, #tpu.memory_space<vmem>>, vector<1x8xf32>,
    return
  }
}

</mosaic_0001>

<llo_original>
// kernel: model_forward.1
$region0: #{model_forward.1}
  #allocation0 [shape = 'u32[]', space=smem, size = 0x4, offset = 0x4, fixed_abs, tag = 'smem constant byte address 0x4 - core index']
  #allocation1 [shape = 'u32[144,128]{1,0:T(1,128)}', space=vmem, size = 0x12000, scoped, tag = 'internal scratch']
  %s0 = inlined_call_operand.hbm [shape: f32[1,5], index: 0, kind: input, shape index: {}]
  %s1 = inlined_call_operand.hbm [shape: f32[6,8], index: 1, kind: input, shape index: {}]
  %s2 = inlined_call_operand.hbm [shape: f32[1,8], index: 2, kind: output, shape index: {}]
  %s3 = sld [smem:[#allocation0]]
  $region26: #{model_forward.1} parent=0
    _
  %s5 = ssub.s32 1, %s3
  %s6 = scalar_select 0, %s5, %s3
  $region1: #{model_forward.1} parent=0
    #allocation2 [shape = 'u8[512]{0}', space=smem, size = 0x200, scoped, tag = 'input window, operand 0, single buffered']
    #allocation3 [shape = 's32[1]{0}', space=sflag, size = 0x4, scoped, tag = 'scoped memory for model_forward.1']
    #allocation4 [shape = 's32[1]{0}', space=sflag, size = 0x4, scoped, tag = 'scoped memory for model_forward.1']
    #allocation5 [shape = 's32[1]{0}', space=sflag, size = 0x4, scoped, tag = 'scoped memory for model_forward.1']
    #allocation6 [shape = 'u8[4096]{0}', space=vmem, size = 0x1000, scoped, tag = 'input window, operand 1, single buffered']
    #allocation7 [shape = 'u8[512]{0}', space=vmem, size = 0x400, scoped, tag = 'output window, operand 0, single buffered']
    %7 = vsyncpa [#allocation5], 0
    %8 = vsyncpa [#allocation3], 0
    %9 = vsyncpa [#allocation4], 0
    // Predicated region
    $region2: #{model_forward.1} parent=1 // pred_check
      _
    $region3: #{model_forward.1} parent=1 // pred_check_branch
      %11 = sbr.rel (0) target = $region5
    $region4: #{model_forward.1} parent=1 // pred_region
      %s13 = ssub.s32 16, 16
      %14 = vsyncadd [#allocation5], %s13
      %17 = dma.hbm_to_smem %s0, 16, [#allocation2], [#allocation5]
    $region5: #{model_forward.1} parent=1 // pred_fallthru
      _
    // Predicated region
    $region6: #{model_forward.1} parent=1 // pred_check
      _
    $region7: #{model_forward.1} parent=1 // pred_check_branch
      %19 = sbr.rel (0) target = $region9
    $region8: #{model_forward.1} parent=1 // pred_region
      %s21 = ssub.s32 128, 128
      %22 = vsyncadd [#allocation3], %s21
      %s24 = sshll.u32 [#allocation6], 4
      %s25 = int_to_ptr.vmem [resolvable:$true] %s24
      %27 = dma.hbm_to_vmem [thread:$0]  %s1, 128, %s25, [#allocation3]
    $region9: #{model_forward.1} parent=1 // pred_fallthru
      _
    // Predicated region
    $region10: #{model_forward.1} parent=1 // pred_check
      _
    $region11: #{model_forward.1} parent=1 // pred_check_branch
      %29 = sbr.rel (0) target = $region13
    $region12: #{model_forward.1} parent=1 // pred_region
      %30 = dma.done [#allocation5], 16
    $region13: #{model_forward.1} parent=1 // pred_fallthru
      _
    // Predicated region
    $region14: #{model_forward.1} parent=1 // pred_check
      _
    $region15: #{model_forward.1} parent=1 // pred_check_branch
      %32 = sbr.rel (0) target = $region17
    $region16: #{model_forward.1} parent=1 // pred_region
      %33 = dma.done [#allocation3], 128
    $region17: #{model_forward.1} parent=1 // pred_fallthru
      _
    %34 = sfence
    %v35 = vld [vmem:[#allocation6 + $0x5] sm:$0x1]
    %s36 = sld [smem:[#allocation2]]
    %v37 = vld [vmem:[#allocation6] sm:$0x1]
    %v38 = vstv %s36
    %v39 = vmul.f32 %v38, %v37
    %v40 = vadd.f32 %v35, %v39
    %s41 = sld [smem:[#allocation2 + $0x1]]
    %v42 = vld [vmem:[#allocation6 + $0x1] sm:$0x1]
    %v43 = vstv %s41
    %v44 = vmul.f32 %v43, %v42
    %v45 = vadd.f32 %v40, %v44
    %s46 = sld [smem:[#allocation2 + $0x2]]
    %v47 = vld [vmem:[#allocation6 + $0x2] sm:$0x1]
    %v48 = vstv %s46
    %v49 = vmul.f32 %v48, %v47
    %v50 = vadd.f32 %v45, %v49
    %s51 = sld [smem:[#allocation2 + $0x3]]
    %v52 = vld [vmem:[#allocation6 + $0x3] sm:$0x1]
    %v53 = vstv %s51
    %v54 = vmul.f32 %v53, %v52
    %v55 = vadd.f32 %v50, %v54
    %s56 = sld [smem:[#allocation2 + $0x4]]
    %v57 = vld [vmem:[#allocation6 + $0x4] sm:$0x1]
    %v58 = vstv %s56
    %v59 = vmul.f32 %v58, %v57
    %v60 = vadd.f32 %v55, %v59
    %vm61 = vcmask 57344
    %v62 = vsel %vm61, %v60, -inf
    %63 = vmax.xlane.f32.xlu0 %v62
    %v64 = vpop.xlane.xlu0 %63
    %v65 = vrot.slane %v64, 4
    %v66 = vmax.f32 %v64, %v65
    %v67 = vrot.slane %v66, 2
    %v68 = vmax.f32 %v66, %v67
    %v69 = vrot.slane %v68, 1
    %v70 = vmax.f32 %v68, %v69
    %s71 = vtos %v70
    %s72 = smin.f32 %s71, 6.0
    %v73 = vstv %s72
    %v74 = vmul.f32 %v60, %v73
    %75 = vst.msk [vmem:[#allocation7] sm:$0x1] %vm61, %v74
    // Predicated region
    $region18: #{model_forward.1} parent=1 // pred_check
      _
    $region19: #{model_forward.1} parent=1 // pred_check_branch
      %77 = sbr.rel (0) target = $region21
    $region20: #{model_forward.1} parent=1 // pred_region
      %s79 = ssub.s32 16, 16
      %80 = vsyncadd [#allocation4], %s79
      %s82 = sshll.u32 [#allocation7], 4
      %s83 = int_to_ptr.vmem [resolvable:$true] %s82
      %85 = dma.vmem_to_hbm [thread:$0]  %s83, 16, %s2, [#allocation4]
    $region21: #{model_forward.1} parent=1 // pred_fallthru
      _
    // Predicated region
    $region22: #{model_forward.1} parent=1 // pred_check
      _
    $region23: #{model_forward.1} parent=1 // pred_check_branch
      %87 = sbr.rel (0) target = $region25
    $region24: #{model_forward.1} parent=1 // pred_region
      %88 = dma.done [#allocation4], 16
    $region25: #{model_forward.1} parent=1 // pred_fallthru
      _
    %89 = vsyncpa [#allocation3], 1
    %90 = vsyncpa [#allocation4], 1
    %91 = vsyncpa [#allocation5], 1

</llo_original>
